<compile_context>
chip_gen: v5e
topology: v5e:2x2
jax: 0.10.0
libtpu: 0.0.40
codegen_flags: <defaults>
</compile_context>

<pallas_src>
import math

import jax
import jax.numpy as jnp
from jax import lax
from jax.experimental import pallas as pl
from jax.experimental.pallas import tpu as pltpu

_SOFTPLUS_THRESHOLD = 20.0            # torch.nn.Softplus default threshold
_BN_EPS = 1e-5                        # torch.nn.BatchNorm1d default eps
_BN_SCALE = 1.0 / math.sqrt(1.0 + _BN_EPS)
_NORM_EPS_SQ = 1e-24                  # (F.normalize eps = 1e-12)^2, clamp on squared norm
_VMEM_LIMIT = 48 * 1024 * 1024        # fits v7x's 64 MiB physical VMEM with headroom


def _round_up(a, b):
    return ((a + b - 1) // b) * b


def _softplus(x):
    # Matches torch.nn.Softplus(beta=1, threshold=20): linear above threshold.
    return jnp.where(x > _SOFTPLUS_THRESHOLD, x,
                     jnp.log1p(jnp.exp(jnp.minimum(x, _SOFTPLUS_THRESHOLD))))


def _mm(a, w, use_bf16):
    # x @ W with f32 accumulation; optionally bf16 MXU inputs.
    if use_bf16:
        a = a.astype(jnp.bfloat16)
        w = w.astype(jnp.bfloat16)
    return jnp.dot(a, w, preferred_element_type=jnp.float32)


def _mm_nt(a, b, use_bf16):
    # a @ b.T without materializing a transpose: both contracting dims = 1,
    # so Mosaic feeds the MXU directly (no XLU vxpose / relayout).
    if use_bf16:
        a = a.astype(jnp.bfloat16)
        b = b.astype(jnp.bfloat16)
    return lax.dot_general(a, b, dimension_numbers=(((1,), (1,)), ((), ())),
                           preferred_element_type=jnp.float32)


# ----------------------------------------------------------------------------
# Kernel A: per-batch-tile encoder/decoder + cluster assignments.
# ----------------------------------------------------------------------------
def _make_encode_assign_kernel(alpha, use_bf16):
    alpha = float(alpha)
    power = (alpha + 1.0) / 2.0

    def kernel(x_ref,
               we1, be1, we2, be2, we3, be3,
               wd1, bd1, wd2, bd2, wd3, bd3,
               centers_ref,
               xrec_ref, z_ref, p_ref, pcos_ref):
        x = x_ref[...]

        # ---- encoder: [Linear+Softplus, Linear+Softplus, Linear] -------------
        h = _softplus(_mm(x, we1[...], use_bf16) + be1[...])
        h = _softplus(_mm(h, we2[...], use_bf16) + be2[...])
        z = _mm(h, we3[...], use_bf16) + be3[...]

        # TODO(synk): training-mode Dropout(p=0.2) and BatchNorm batch statistics
        # are not reproduced; eval semantics (dropout identity, running mean=0,
        # var=1) are used.
        z_bn = z * _BN_SCALE
        z_ref[...] = z_bn

        # ---- decoder (encoder module computes x_rec; LSR_clus discards it) ---
        d = _softplus(_mm(z_bn, wd1[...], use_bf16) + bd1[...])
        d = _softplus(_mm(d, wd2[...], use_bf16) + bd2[...])
        xrec_ref[...] = _mm(d, wd3[...], use_bf16) + bd3[...]

        c = centers_ref[...]

        # ---- cluster_assign (Student's t) -------------------------------------
        # ||z - c||^2 = ||z||^2 + ||c||^2 - 2 z.c  (MXU-friendly, no (N,K,D) blowup)
        z2 = jnp.sum(z_bn * z_bn, axis=1, keepdims=True)                # (tb, 1)
        ones_row = jnp.ones((1, c.shape[1]), jnp.float32)
        c2 = _mm_nt(ones_row, c * c, use_bf16)                          # (1, K)
        zc = _mm_nt(z_bn, c, use_bf16)                                  # (tb, K)
        ns = jnp.maximum(z2 + c2 - 2.0 * zc, 0.0)
        num = 1.0 / (1.0 + ns * (1.0 / alpha))
        if power != 1.0:
            num = num ** power
        p_ref[...] = num / jnp.sum(num, axis=1, keepdims=True)

        # ---- cluster_assign_cosine --------------------------------------------
        # TODO(synk): the in-place renormalization of cluster_centers.data is a
        # parameter side effect; it is applied functionally here, not persisted.
        c_ss = jnp.sum(c * c, axis=1, keepdims=True)
        c_unit = c * lax.rsqrt(jnp.maximum(c_ss, _NORM_EPS_SQ))
        logits = _mm_nt(z_bn, c_unit, use_bf16)                         # (tb, K)
        m = jnp.max(logits, axis=1, keepdims=True)
        e = jnp.exp(logits - m)
        pcos_ref[...] = e / jnp.sum(e, axis=1, keepdims=True)

    return kernel


# ----------------------------------------------------------------------------
# Kernel B: sim matrix, 2-D (qi, kj) grid -> lane-dense (tb, tb) output tiles.
# ----------------------------------------------------------------------------
def _make_sim_kernel(use_bf16):
    def kernel(zq_ref, zk_ref, sim_ref):
        def _unit(v):
            ss = jnp.sum(v * v, axis=1, keepdims=True)
            return v * lax.rsqrt(jnp.maximum(ss, _NORM_EPS_SQ))   # EUP rsqrt
        sim_ref[...] = _mm_nt(_unit(zq_ref[...]), _unit(zk_ref[...]), use_bf16)
    return kernel


# ----------------------------------------------------------------------------
# Wrapper: LSR_clus.forward -> (p, p_cosine, sim)
# ----------------------------------------------------------------------------
def lsr_clus_forward(x, enc_params, cluster_centers, alpha=1.0, *,
                     use_bf16=False, batch_tile=256):
    n, input_dim = x.shape
    z_dim = enc_params[4].shape[1]
    n_clusters = cluster_centers.shape[0]

    # Batch tiling: 256-row tiles (multiple of 128 keeps MXU rows and sim output
    # lanes dense); small batches collapse to a single full-extent tile.
    if n >= batch_tile:
        tb = batch_tile
    else:
        tb = _round_up(max(n, 8), 8)
    n_pad = _round_up(n, tb)
    xp = x if n_pad == n else jnp.pad(x, ((0, n_pad - n), (0, 0)))
    num_tiles = n_pad // tb

    if use_bf16:
        # Cast only matmul weights; biases / centers / all accumulation stay f32.
        enc_params = tuple(p.astype(jnp.bfloat16) if i % 2 == 0 else p
                           for i, p in enumerate(enc_params))

    def _resident(arr):
        # Constant index_map -> buffer stays VMEM-resident across grid steps.
        return pl.BlockSpec(arr.shape, lambda i: (0, 0))

    x_rec, z, p, p_cos = pl.pallas_call(
        _make_encode_assign_kernel(alpha, use_bf16),
        grid=(num_tiles,),
        in_specs=[pl.BlockSpec((tb, input_dim), lambda i: (i, 0))]
                 + [_resident(w) for w in enc_params]
                 + [_resident(cluster_centers)],
        out_specs=(
            pl.BlockSpec((tb, input_dim), lambda i: (i, 0)),
            pl.BlockSpec((tb, z_dim), lambda i: (i, 0)),
            pl.BlockSpec((tb, n_clusters), lambda i: (i, 0)),
            pl.BlockSpec((tb, n_clusters), lambda i: (i, 0)),
        ),
        out_shape=(
            jax.ShapeDtypeStruct((n_pad, input_dim), jnp.float32),
            jax.ShapeDtypeStruct((n_pad, z_dim), jnp.float32),
            jax.ShapeDtypeStruct((n_pad, n_clusters), jnp.float32),
            jax.ShapeDtypeStruct((n_pad, n_clusters), jnp.float32),
        ),
        compiler_params=pltpu.CompilerParams(
            dimension_semantics=("parallel",),
            vmem_limit_bytes=_VMEM_LIMIT),
    )(xp, *enc_params, cluster_centers)
    del x_rec  # computed by the encoder module, discarded by LSR_clus.forward

    sim = pl.pallas_call(
        _make_sim_kernel(use_bf16),
        grid=(num_tiles, num_tiles),
        in_specs=[pl.BlockSpec((tb, z_dim), lambda qi, kj: (qi, 0)),
                  pl.BlockSpec((tb, z_dim), lambda qi, kj: (kj, 0))],
        out_specs=pl.BlockSpec((tb, tb), lambda qi, kj: (qi, kj)),
        out_shape=jax.ShapeDtypeStruct((n_pad, n_pad), jnp.float32),
        compiler_params=pltpu.CompilerParams(
            dimension_semantics=("parallel", "parallel"),
            vmem_limit_bytes=_VMEM_LIMIT),
    )(z, z)

    return p[:n], p_cos[:n], sim[:n, :n]


# ----------------------------------------------------------------------------
# Parameter init (deterministic, PyTorch-style)
# ----------------------------------------------------------------------------
def init_params(key, input_dim, hidden_dims):
    """PyTorch-Linear-style uniform init. Weights stored as (in, out)."""
    enc_dims = [input_dim] + list(hidden_dims)
    dec_dims = list(reversed(hidden_dims)) + [input_dim]
    params = []
    for dims in (enc_dims, dec_dims):
        for i in range(len(dims) - 1):
            fan_in, fan_out = dims[i], dims[i + 1]
            key, kw, kb = jax.random.split(key, 3)
            bound = 1.0 / math.sqrt(fan_in)
            w = jax.random.uniform(kw, (fan_in, fan_out), jnp.float32, -bound, bound)
            b = jax.random.uniform(kb, (1, fan_out), jnp.float32, -bound, bound)
            params += [w, b]
    return tuple(params)


def init_cluster_centers(key, cluster_number, hidden_dimension):
    """torch.nn.init.xavier_normal_ on a (K, D) tensor."""
    std = math.sqrt(2.0 / (cluster_number + hidden_dimension))
    return std * jax.random.normal(key, (cluster_number, hidden_dimension), jnp.float32)


# ----------------------------------------------------------------------------
# Pure-JAX reference mirroring the PyTorch eval-mode forward.
# ----------------------------------------------------------------------------
def reference_forward(x, enc_params, cluster_centers, alpha=1.0):
    we1, be1, we2, be2, we3, be3, wd1, bd1, wd2, bd2, wd3, bd3 = enc_params
    sp = lambda v: jnp.where(v > 20.0, v, jnp.log1p(jnp.exp(jnp.minimum(v, 20.0))))
    h = sp(x @ we1 + be1)
    h = sp(h @ we2 + be2)
    z = h @ we3 + be3
    z = z / jnp.sqrt(1.0 + _BN_EPS)                       # BatchNorm1d eval
    _x_rec = (sp(sp(z @ wd1 + bd1) @ wd2 + bd2)) @ wd3 + bd3   # discarded
    zn = z / jnp.maximum(jnp.linalg.norm(z, axis=1, keepdims=True), 1e-12)
    sim = zn @ zn.T
    inner = z[:, None, :] - cluster_centers[None, :, :]
    ns = jnp.sum(inner ** 2, axis=2)
    num = 1.0 / (1.0 + ns / alpha)
    num = num ** ((alpha + 1.0) / 2.0)
    p = num / jnp.sum(num, axis=1, keepdims=True)
    cn = cluster_centers / jnp.maximum(
        jnp.linalg.norm(cluster_centers, axis=1, keepdims=True), 1e-12)
    p_cos = jax.nn.softmax(z @ cn.T, axis=-1)
    return p, p_cos, sim


if __name__ == "__main__":
    key = jax.random.PRNGKey(0)
    k_x, k_p, k_c, k_x2 = jax.random.split(key, 4)

    batch = 8
    input_dim = 64
    hidden_dims = [32, 16, 32]     # palindrome MLP; latent z dim = 32
    n_clusters = 4
    alpha = 1.0

    params = init_params(k_p, input_dim, hidden_dims)
    centers = init_cluster_centers(k_c, n_clusters, hidden_dims[-1])
    x = jax.random.normal(k_x, (batch, input_dim), dtype=jnp.float32)

    # ---- f32 path, single-tile grid ------------------------------------------
    p, p_cos, sim = jax.block_until_ready(lsr_clus_forward(x, params, centers, alpha))
    p_r, pc_r, sim_r = reference_forward(x, params, centers, alpha)
    assert p.shape == (batch, n_clusters) and p_cos.shape == (batch, n_clusters)
    assert sim.shape == (batch, batch)
    assert jnp.allclose(p, p_r, atol=1e-4, rtol=1e-4)
    assert jnp.allclose(p_cos, pc_r, atol=1e-4, rtol=1e-4)
    assert jnp.allclose(sim, sim_r, atol=1e-4, rtol=1e-4)

    # ---- f32 path, multi-tile grid + batch padding (exercises production tiling)
    n2 = 272
    x2 = jax.random.normal(k_x2, (n2, input_dim), dtype=jnp.float32)
    p2, pc2, sim2 = jax.block_until_ready(
        lsr_clus_forward(x2, params, centers, alpha, batch_tile=128))
    p2_r, pc2_r, sim2_r = reference_forward(x2, params, centers, alpha)
    assert p2.shape == (n2, n_clusters) and sim2.shape == (n2, n2)
    assert jnp.allclose(p2, p2_r, atol=1e-4, rtol=1e-4)
    assert jnp.allclose(pc2, pc2_r, atol=1e-4, rtol=1e-4)
    assert jnp.allclose(sim2, sim2_r, atol=1e-4, rtol=1e-4)

    # ---- bf16 MXU-input path (f32 accumulation) — loose smoke-check tolerance --
    pb, pcb, simb = jax.block_until_ready(
        lsr_clus_forward(x, params, centers, alpha, use_bf16=True))
    assert jnp.allclose(pb, p_r, atol=1e-1, rtol=1e-1)
    assert jnp.allclose(pcb, pc_r, atol=1e-1, rtol=1e-1)
    assert jnp.allclose(simb, sim_r, atol=1e-1, rtol=1e-1)

    print("KERNEL_OK")
</pallas_src>

<mosaic_0001>
module attributes {stable_mosaic.version = 11 : i64} {
  func.func @kernel(%arg0: i32, %arg1: memref<8x64xf32, #tpu.memory_space<vmem>>, %arg2: memref<64x32xf32, #tpu.memory_space<vmem>>, %arg3: memref<1x32xf32, #tpu.memory_space<vmem>>, %arg4: memref<32x16xf32, #tpu.memory_space<vmem>>, %arg5: memref<1x16xf32, #tpu.memory_space<vmem>>, %arg6: memref<16x32xf32, #tpu.memory_space<vmem>>, %arg7: memref<1x32xf32, #tpu.memory_space<vmem>>, %arg8: memref<32x16xf32, #tpu.memory_space<vmem>>, %arg9: memref<1x16xf32, #tpu.memory_space<vmem>>, %arg10: memref<16x32xf32, #tpu.memory_space<vmem>>, %arg11: memref<1x32xf32, #tpu.memory_space<vmem>>, %arg12: memref<32x64xf32, #tpu.memory_space<vmem>>, %arg13: memref<1x64xf32, #tpu.memory_space<vmem>>, %arg14: memref<4x32xf32, #tpu.memory_space<vmem>>, %arg15: memref<8x64xf32, #tpu.memory_space<vmem>>, %arg16: memref<8x32xf32, #tpu.memory_space<vmem>>, %arg17: memref<8x4xf32, #tpu.memory_space<vmem>>, %arg18: memref<8x4xf32, #tpu.memory_space<vmem>>) attributes {dimension_semantics = [#tpu.dimension_semantics<parallel>], iteration_bounds = array<i64: 1>, scalar_prefetch = 0 : i64, scratch_operands = 0 : i64, tpu.core_type = #tpu.core_type<tc>, window_params = [{transform_indices = @transform_0, window_bounds = array<i64: 8, 64>}, {pipeline_mode = #tpu.pipeline_mode<synchronous>, transform_indices = @transform_1, window_bounds = array<i64: 64, 32>}, {pipeline_mode = #tpu.pipeline_mode<synchronous>, transform_indices = @transform_2, window_bounds = array<i64: 1, 32>}, {pipeline_mode = #tpu.pipeline_mode<synchronous>, transform_indices = @transform_3, window_bounds = array<i64: 32, 16>}, {pipeline_mode = #tpu.pipeline_mode<synchronous>, transform_indices = @transform_4, window_bounds = array<i64: 1, 16>}, {pipeline_mode = #tpu.pipeline_mode<synchronous>, transform_indices = @transform_5, window_bounds = array<i64: 16, 32>}, {pipeline_mode = #tpu.pipeline_mode<synchronous>, transform_indices = @transform_6, window_bounds = array<i64: 1, 32>}, {pipeline_mode = #tpu.pipeline_mode<synchronous>, transform_indices = @transform_7, window_bounds = array<i64: 32, 16>}, {pipeline_mode = #tpu.pipeline_mode<synchronous>, transform_indices = @transform_8, window_bounds = array<i64: 1, 16>}, {pipeline_mode = #tpu.pipeline_mode<synchronous>, transform_indices = @transform_9, window_bounds = array<i64: 16, 32>}, {pipeline_mode = #tpu.pipeline_mode<synchronous>, transform_indices = @transform_10, window_bounds = array<i64: 1, 32>}, {pipeline_mode = #tpu.pipeline_mode<synchronous>, transform_indices = @transform_11, window_bounds = array<i64: 32, 64>}, {pipeline_mode = #tpu.pipeline_mode<synchronous>, transform_indices = @transform_12, window_bounds = array<i64: 1, 64>}, {pipeline_mode = #tpu.pipeline_mode<synchronous>, transform_indices = @transform_13, window_bounds = array<i64: 4, 32>}, {transform_indices = @transform_14, window_bounds = array<i64: 8, 64>}, {transform_indices = @transform_15, window_bounds = array<i64: 8, 32>}, {transform_indices = @transform_16, window_bounds = array<i64: 8, 4>}, {transform_indices = @transform_17, window_bounds = array<i64: 8, 4>}]} {
    %c0 = arith.constant 0 : index
    %c0_0 = arith.constant 0 : index
    %0 = vector.load %arg1[%c0, %c0_0] : memref<8x64xf32, #tpu.memory_space<vmem>>, vector<8x64xf32>
    %c0_1 = arith.constant 0 : index
    %c0_2 = arith.constant 0 : index
    %1 = vector.load %arg2[%c0_1, %c0_2] : memref<64x32xf32, #tpu.memory_space<vmem>>, vector<64x32xf32>
    %cst = arith.constant dense<0.000000e+00> : vector<8x32xf32>
    %2 = tpu.matmul %0, %1, %cst {dimension_numbers = #tpu.dot_dimension_numbers<[1], [0], [0], [1], [0, 0, 1, 1], [], []>} : vector<8x64xf32>, vector<64x32xf32>, vector<8x32xf32> -> vector<8x32xf32>
    %c0_3 = arith.constant 0 : index
    %c0_4 = arith.constant 0 : index
    %3 = vector.load %arg3[%c0_3, %c0_4] : memref<1x32xf32, #tpu.memory_space<vmem>>, vector<1x32xf32>
    %4 = vector.broadcast %3 : vector<1x32xf32> to vector<8x32xf32>
    %5 = arith.addf %2, %4 : vector<8x32xf32>
    %cst_5 = arith.constant 2.000000e+01 : f32
    %6 = vector.broadcast %cst_5 : f32 to vector<8x32xf32>
    %7 = arith.cmpf ogt, %5, %6 : vector<8x32xf32>
    %cst_6 = arith.constant 2.000000e+01 : f32
    %8 = vector.broadcast %cst_6 : f32 to vector<8x32xf32>
    %9 = arith.minimumf %5, %8 : vector<8x32xf32>
    %10 = math.exp %9 : vector<8x32xf32>
    %11 = math.log1p %10 : vector<8x32xf32>
    %12 = arith.select %7, %5, %11 : vector<8x32xi1>, vector<8x32xf32>
    %c0_7 = arith.constant 0 : index
    %c0_8 = arith.constant 0 : index
    %13 = vector.load %arg4[%c0_7, %c0_8] : memref<32x16xf32, #tpu.memory_space<vmem>>, vector<32x16xf32>
    %cst_9 = arith.constant dense<0.000000e+00> : vector<8x16xf32>
    %14 = tpu.matmul %12, %13, %cst_9 {dimension_numbers = #tpu.dot_dimension_numbers<[1], [0], [0], [1], [0, 0, 1, 1], [], []>} : vector<8x32xf32>, vector<32x16xf32>, vector<8x16xf32> -> vector<8x16xf32>
    %c0_10 = arith.constant 0 : index
    %c0_11 = arith.constant 0 : index
    %15 = vector.load %arg5[%c0_10, %c0_11] : memref<1x16xf32, #tpu.memory_space<vmem>>, vector<1x16xf32>
    %16 = vector.broadcast %15 : vector<1x16xf32> to vector<8x16xf32>
    %17 = arith.addf %14, %16 : vector<8x16xf32>
    %cst_12 = arith.constant 2.000000e+01 : f32
    %18 = vector.broadcast %cst_12 : f32 to vector<8x16xf32>
    %19 = arith.cmpf ogt, %17, %18 : vector<8x16xf32>
    %cst_13 = arith.constant 2.000000e+01 : f32
    %20 = vector.broadcast %cst_13 : f32 to vector<8x16xf32>
    %21 = arith.minimumf %17, %20 : vector<8x16xf32>
    %22 = math.exp %21 : vector<8x16xf32>
    %23 = math.log1p %22 : vector<8x16xf32>
    %24 = arith.select %19, %17, %23 : vector<8x16xi1>, vector<8x16xf32>
    %c0_14 = arith.constant 0 : index
    %c0_15 = arith.constant 0 : index
    %25 = vector.load %arg6[%c0_14, %c0_15] : memref<16x32xf32, #tpu.memory_space<vmem>>, vector<16x32xf32>
    %cst_16 = arith.constant dense<0.000000e+00> : vector<8x32xf32>
    %26 = tpu.matmul %24, %25, %cst_16 {dimension_numbers = #tpu.dot_dimension_numbers<[1], [0], [0], [1], [0, 0, 1, 1], [], []>} : vector<8x16xf32>, vector<16x32xf32>, vector<8x32xf32> -> vector<8x32xf32>
    %c0_17 = arith.constant 0 : index
    %c0_18 = arith.constant 0 : index
    %27 = vector.load %arg7[%c0_17, %c0_18] : memref<1x32xf32, #tpu.memory_space<vmem>>, vector<1x32xf32>
    %28 = vector.broadcast %27 : vector<1x32xf32> to vector<8x32xf32>
    %29 = arith.addf %26, %28 : vector<8x32xf32>
    %cst_19 = arith.constant 0.999994993 : f32
    %30 = vector.broadcast %cst_19 : f32 to vector<8x32xf32>
    %31 = arith.mulf %29, %30 : vector<8x32xf32>
    %c0_20 = arith.constant 0 : index
    %c0_21 = arith.constant 0 : index
    %32 = vector.load %arg16[%c0_20, %c0_21] : memref<8x32xf32, #tpu.memory_space<vmem>>, vector<8x32xf32>
    tpu.vector_store %arg16[%c0_20, %c0_21], %31 {strides = array<i32>} : memref<8x32xf32, #tpu.memory_space<vmem>>, vector<8x32xf32>,
    %c0_22 = arith.constant 0 : index
    %c0_23 = arith.constant 0 : index
    %33 = vector.load %arg8[%c0_22, %c0_23] : memref<32x16xf32, #tpu.memory_space<vmem>>, vector<32x16xf32>
    %cst_24 = arith.constant dense<0.000000e+00> : vector<8x16xf32>
    %34 = tpu.matmul %31, %33, %cst_24 {dimension_numbers = #tpu.dot_dimension_numbers<[1], [0], [0], [1], [0, 0, 1, 1], [], []>} : vector<8x32xf32>, vector<32x16xf32>, vector<8x16xf32> -> vector<8x16xf32>
    %c0_25 = arith.constant 0 : index
    %c0_26 = arith.constant 0 : index
    %35 = vector.load %arg9[%c0_25, %c0_26] : memref<1x16xf32, #tpu.memory_space<vmem>>, vector<1x16xf32>
    %36 = vector.broadcast %35 : vector<1x16xf32> to vector<8x16xf32>
    %37 = arith.addf %34, %36 : vector<8x16xf32>
    %cst_27 = arith.constant 2.000000e+01 : f32
    %38 = vector.broadcast %cst_27 : f32 to vector<8x16xf32>
    %39 = arith.cmpf ogt, %37, %38 : vector<8x16xf32>
    %cst_28 = arith.constant 2.000000e+01 : f32
    %40 = vector.broadcast %cst_28 : f32 to vector<8x16xf32>
    %41 = arith.minimumf %37, %40 : vector<8x16xf32>
    %42 = math.exp %41 : vector<8x16xf32>
    %43 = math.log1p %42 : vector<8x16xf32>
    %44 = arith.select %39, %37, %43 : vector<8x16xi1>, vector<8x16xf32>
    %c0_29 = arith.constant 0 : index
    %c0_30 = arith.constant 0 : index
    %45 = vector.load %arg10[%c0_29, %c0_30] : memref<16x32xf32, #tpu.memory_space<vmem>>, vector<16x32xf32>
    %cst_31 = arith.constant dense<0.000000e+00> : vector<8x32xf32>
    %46 = tpu.matmul %44, %45, %cst_31 {dimension_numbers = #tpu.dot_dimension_numbers<[1], [0], [0], [1], [0, 0, 1, 1], [], []>} : vector<8x16xf32>, vector<16x32xf32>, vector<8x32xf32> -> vector<8x32xf32>
    %c0_32 = arith.constant 0 : index
    %c0_33 = arith.constant 0 : index
    %47 = vector.load %arg11[%c0_32, %c0_33] : memref<1x32xf32, #tpu.memory_space<vmem>>, vector<1x32xf32>
    %48 = vector.broadcast %47 : vector<1x32xf32> to vector<8x32xf32>
    %49 = arith.addf %46, %48 : vector<8x32xf32>
    %cst_34 = arith.constant 2.000000e+01 : f32
    %50 = vector.broadcast %cst_34 : f32 to vector<8x32xf32>
    %51 = arith.cmpf ogt, %49, %50 : vector<8x32xf32>
    %cst_35 = arith.constant 2.000000e+01 : f32
    %52 = vector.broadcast %cst_35 : f32 to vector<8x32xf32>
    %53 = arith.minimumf %49, %52 : vector<8x32xf32>
    %54 = math.exp %53 : vector<8x32xf32>
    %55 = math.log1p %54 : vector<8x32xf32>
    %56 = arith.select %51, %49, %55 : vector<8x32xi1>, vector<8x32xf32>
    %c0_36 = arith.constant 0 : index
    %c0_37 = arith.constant 0 : index
    %57 = vector.load %arg12[%c0_36, %c0_37] : memref<32x64xf32, #tpu.memory_space<vmem>>, vector<32x64xf32>
    %cst_38 = arith.constant dense<0.000000e+00> : vector<8x64xf32>
    %58 = tpu.matmul %56, %57, %cst_38 {dimension_numbers = #tpu.dot_dimension_numbers<[1], [0], [0], [1], [0, 0, 1, 1], [], []>} : vector<8x32xf32>, vector<32x64xf32>, vector<8x64xf32> -> vector<8x64xf32>
    %c0_39 = arith.constant 0 : index
    %c0_40 = arith.constant 0 : index
    %59 = vector.load %arg13[%c0_39, %c0_40] : memref<1x64xf32, #tpu.memory_space<vmem>>, vector<1x64xf32>
    %60 = vector.broadcast %59 : vector<1x64xf32> to vector<8x64xf32>
    %61 = arith.addf %58, %60 : vector<8x64xf32>
    %c0_41 = arith.constant 0 : index
    %c0_42 = arith.constant 0 : index
    %62 = vector.load %arg15[%c0_41, %c0_42] : memref<8x64xf32, #tpu.memory_space<vmem>>, vector<8x64xf32>
    tpu.vector_store %arg15[%c0_41, %c0_42], %61 {strides = array<i32>} : memref<8x64xf32, #tpu.memory_space<vmem>>, vector<8x64xf32>,
    %c0_43 = arith.constant 0 : index
    %c0_44 = arith.constant 0 : index
    %63 = vector.load %arg14[%c0_43, %c0_44] : memref<4x32xf32, #tpu.memory_space<vmem>>, vector<4x32xf32>
    %64 = arith.mulf %31, %31 : vector<8x32xf32>
    %cst_45 = arith.constant dense<0.000000e+00> : vector<8xf32>
    %65 = vector.multi_reduction <add>, %64, %cst_45 [1] : vector<8x32xf32> to vector<8xf32>
    %66 = vector.shape_cast %65 : vector<8xf32> to vector<8x1xf32>
    %cst_46 = arith.constant 1.000000e+00 : f32
    %67 = vector.broadcast %cst_46 : f32 to vector<1x32xf32>
    %68 = arith.mulf %63, %63 : vector<4x32xf32>
    %cst_47 = arith.constant dense<0.000000e+00> : vector<1x4xf32>
    %69 = tpu.matmul %67, %68, %cst_47 {dimension_numbers = #tpu.dot_dimension_numbers<[1], [1], [0], [0], [0, 0, 1, 0], [], []>} : vector<1x32xf32>, vector<4x32xf32>, vector<1x4xf32> -> vector<1x4xf32>
    %cst_48 = arith.constant dense<0.000000e+00> : vector<8x4xf32>
    %70 = tpu.matmul %31, %63, %cst_48 {dimension_numbers = #tpu.dot_dimension_numbers<[1], [1], [0], [0], [0, 0, 1, 0], [], []>} : vector<8x32xf32>, vector<4x32xf32>, vector<8x4xf32> -> vector<8x4xf32>
    %71 = vector.broadcast %66 : vector<8x1xf32> to vector<8x4xf32>
    %72 = vector.broadcast %69 : vector<1x4xf32> to vector<8x4xf32>
    %73 = arith.addf %71, %72 : vector<8x4xf32>
    %cst_49 = arith.constant 2.000000e+00 : f32
    %74 = vector.broadcast %cst_49 : f32 to vector<8x4xf32>
    %75 = arith.mulf %74, %70 : vector<8x4xf32>
    %76 = arith.subf %73, %75 : vector<8x4xf32>
    %cst_50 = arith.constant 0.000000e+00 : f32
    %77 = vector.broadcast %cst_50 : f32 to vector<8x4xf32>
    %78 = arith.maximumf %76, %77 : vector<8x4xf32>
    %cst_51 = arith.constant 1.000000e+00 : f32
    %79 = vector.broadcast %cst_51 : f32 to vector<8x4xf32>
    %80 = arith.mulf %78, %79 : vector<8x4xf32>
    %cst_52 = arith.constant 1.000000e+00 : f32
    %81 = vector.broadcast %cst_52 : f32 to vector<8x4xf32>
    %82 = arith.addf %81, %80 : vector<8x4xf32>
    %cst_53 = arith.constant 1.000000e+00 : f32
    %83 = vector.broadcast %cst_53 : f32 to vector<8x4xf32>
    %84 = arith.divf %83, %82 : vector<8x4xf32>
    %cst_54 = arith.constant dense<0.000000e+00> : vector<8xf32>
    %85 = vector.multi_reduction <add>, %84, %cst_54 [1] : vector<8x4xf32> to vector<8xf32>
    %86 = vector.shape_cast %85 : vector<8xf32> to vector<8x1xf32>
    %87 = vector.broadcast %86 : vector<8x1xf32> to vector<8x4xf32>
    %88 = arith.divf %84, %87 : vector<8x4xf32>
    %c0_55 = arith.constant 0 : index
    %c0_56 = arith.constant 0 : index
    %89 = vector.load %arg17[%c0_55, %c0_56] : memref<8x4xf32, #tpu.memory_space<vmem>>, vector<8x4xf32>
    tpu.vector_store %arg17[%c0_55, %c0_56], %88 {strides = array<i32>} : memref<8x4xf32, #tpu.memory_space<vmem>>, vector<8x4xf32>,
    %90 = arith.mulf %63, %63 : vector<4x32xf32>
    %cst_57 = arith.constant dense<0.000000e+00> : vector<4xf32>
    %91 = vector.multi_reduction <add>, %90, %cst_57 [1] : vector<4x32xf32> to vector<4xf32>
    %92 = vector.shape_cast %91 : vector<4xf32> to vector<4x1xf32>
    %cst_58 = arith.constant 1.000000e-24 : f32
    %93 = vector.broadcast %cst_58 : f32 to vector<4x1xf32>
    %94 = arith.maximumf %92, %93 : vector<4x1xf32>
    %95 = math.rsqrt %94 : vector<4x1xf32>
    %96 = vector.broadcast %95 : vector<4x1xf32> to vector<4x32xf32>
    %97 = arith.mulf %63, %96 : vector<4x32xf32>
    %cst_59 = arith.constant dense<0.000000e+00> : vector<8x4xf32>
    %98 = tpu.matmul %31, %97, %cst_59 {dimension_numbers = #tpu.dot_dimension_numbers<[1], [1], [0], [0], [0, 0, 1, 0], [], []>} : vector<8x32xf32>, vector<4x32xf32>, vector<8x4xf32> -> vector<8x4xf32>
    %cst_60 = arith.constant dense<0xFF800000> : vector<8xf32>
    %99 = vector.multi_reduction <maximumf>, %98, %cst_60 [1] : vector<8x4xf32> to vector<8xf32>
    %100 = vector.shape_cast %99 : vector<8xf32> to vector<8x1xf32>
    %101 = vector.broadcast %100 : vector<8x1xf32> to vector<8x4xf32>
    %102 = arith.subf %98, %101 : vector<8x4xf32>
    %103 = math.exp %102 : vector<8x4xf32>
    %cst_61 = arith.constant dense<0.000000e+00> : vector<8xf32>
    %104 = vector.multi_reduction <add>, %103, %cst_61 [1] : vector<8x4xf32> to vector<8xf32>
    %105 = vector.shape_cast %104 : vector<8xf32> to vector<8x1xf32>
    %106 = vector.broadcast %105 : vector<8x1xf32> to vector<8x4xf32>
    %107 = arith.divf %103, %106 : vector<8x4xf32>
    %c0_62 = arith.constant 0 : index
    %c0_63 = arith.constant 0 : index
    %108 = vector.load %arg18[%c0_62, %c0_63] : memref<8x4xf32, #tpu.memory_space<vmem>>, vector<8x4xf32>
    tpu.vector_store %arg18[%c0_62, %c0_63], %107 {strides = array<i32>} : memref<8x4xf32, #tpu.memory_space<vmem>>, vector<8x4xf32>,
    return
  }
  func.func @transform_0(%arg0: i32) -> (i32, i32) {
    %c0_i32 = arith.constant 0 : i32
    %c0_i32_0 = arith.constant 0 : i32
    return %arg0, %c0_i32 : i32, i32
  }
  func.func @transform_1(%arg0: i32) -> (i32, i32) {
    %c0_i32 = arith.constant 0 : i32
    %c0_i32_0 = arith.constant 0 : i32
    %c0_i32_1 = arith.constant 0 : i32
    return %c0_i32, %c0_i32_0 : i32, i32
  }
  func.func @transform_2(%arg0: i32) -> (i32, i32) {
    %c0_i32 = arith.constant 0 : i32
    %c0_i32_0 = arith.constant 0 : i32
    %c0_i32_1 = arith.constant 0 : i32
    return %c0_i32, %c0_i32_0 : i32, i32
  }
  func.func @transform_3(%arg0: i32) -> (i32, i32) {
    %c0_i32 = arith.constant 0 : i32
    %c0_i32_0 = arith.constant 0 : i32
    %c0_i32_1 = arith.constant 0 : i32
    return %c0_i32, %c0_i32_0 : i32, i32
  }
  func.func @transform_4(%arg0: i32) -> (i32, i32) {
    %c0_i32 = arith.constant 0 : i32
    %c0_i32_0 = arith.constant 0 : i32
    %c0_i32_1 = arith.constant 0 : i32
    return %c0_i32, %c0_i32_0 : i32, i32
  }
  func.func @transform_5(%arg0: i32) -> (i32, i32) {
    %c0_i32 = arith.constant 0 : i32
    %c0_i32_0 = arith.constant 0 : i32
    %c0_i32_1 = arith.constant 0 : i32
    return %c0_i32, %c0_i32_0 : i32, i32
  }
  func.func @transform_6(%arg0: i32) -> (i32, i32) {
    %c0_i32 = arith.constant 0 : i32
    %c0_i32_0 = arith.constant 0 : i32
    %c0_i32_1 = arith.constant 0 : i32
    return %c0_i32, %c0_i32_0 : i32, i32
  }
  func.func @transform_7(%arg0: i32) -> (i32, i32) {
    %c0_i32 = arith.constant 0 : i32
    %c0_i32_0 = arith.constant 0 : i32
    %c0_i32_1 = arith.constant 0 : i32
    return %c0_i32, %c0_i32_0 : i32, i32
  }
  func.func @transform_8(%arg0: i32) -> (i32, i32) {
    %c0_i32 = arith.constant 0 : i32
    %c0_i32_0 = arith.constant 0 : i32
    %c0_i32_1 = arith.constant 0 : i32
    return %c0_i32, %c0_i32_0 : i32, i32
  }
  func.func @transform_9(%arg0: i32) -> (i32, i32) {
    %c0_i32 = arith.constant 0 : i32
    %c0_i32_0 = arith.constant 0 : i32
    %c0_i32_1 = arith.constant 0 : i32
    return %c0_i32, %c0_i32_0 : i32, i32
  }
  func.func @transform_10(%arg0: i32) -> (i32, i32) {
    %c0_i32 = arith.constant 0 : i32
    %c0_i32_0 = arith.constant 0 : i32
    %c0_i32_1 = arith.constant 0 : i32
    return %c0_i32, %c0_i32_0 : i32, i32
  }
  func.func @transform_11(%arg0: i32) -> (i32, i32) {
    %c0_i32 = arith.constant 0 : i32
    %c0_i32_0 = arith.constant 0 : i32
    %c0_i32_1 = arith.constant 0 : i32
    return %c0_i32, %c0_i32_0 : i32, i32
  }
  func.func @transform_12(%arg0: i32) -> (i32, i32) {
    %c0_i32 = arith.constant 0 : i32
    %c0_i32_0 = arith.constant 0 : i32
    %c0_i32_1 = arith.constant 0 : i32
    return %c0_i32, %c0_i32_0 : i32, i32
  }
  func.func @transform_13(%arg0: i32) -> (i32, i32) {
    %c0_i32 = arith.constant 0 : i32
    %c0_i32_0 = arith.constant 0 : i32
    %c0_i32_1 = arith.constant 0 : i32
    return %c0_i32, %c0_i32_0 : i32, i32
  }
  func.func @transform_14(%arg0: i32) -> (i32, i32) {
    %c0_i32 = arith.constant 0 : i32
    %c0_i32_0 = arith.constant 0 : i32
    return %arg0, %c0_i32 : i32, i32
  }
  func.func @transform_15(%arg0: i32) -> (i32, i32) {
    %c0_i32 = arith.constant 0 : i32
    %c0_i32_0 = arith.constant 0 : i32
    return %arg0, %c0_i32 : i32, i32
  }
  func.func @transform_16(%arg0: i32) -> (i32, i32) {
    %c0_i32 = arith.constant 0 : i32
    %c0_i32_0 = arith.constant 0 : i32
    return %arg0, %c0_i32 : i32, i32
  }
  func.func @transform_17(%arg0: i32) -> (i32, i32) {
    %c0_i32 = arith.constant 0 : i32
    %c0_i32_0 = arith.constant 0 : i32
    return %arg0, %c0_i32 : i32, i32
  }
}

</mosaic_0001>

<llo_original>
// kernel: tpu_custom_call.1
$region0: #{tpu_custom_call.1}
  #allocation0 [shape = 'u32[]', space=smem, size = 0x4, offset = 0x4, fixed_abs, tag = 'smem constant byte address 0x4 - core index']
  #allocation1 [shape = 'u32[72,128]{1,0:T(1,128)}', space=vmem, size = 0x9000, scoped, tag = 'internal scratch']
  %s0 = inlined_call_operand.vmem [shape: f32[8,64], index: 0, kind: input, shape index: {}]
  %s1 = inlined_call_operand.vmem [shape: f32[64,32], index: 1, kind: input, shape index: {}]
  %s2 = inlined_call_operand.vmem [shape: f32[1,32], index: 2, kind: input, shape index: {}]
  %s3 = inlined_call_operand.vmem [shape: f32[32,16], index: 3, kind: input, shape index: {}]
  %s4 = inlined_call_operand.vmem [shape: f32[1,16], index: 4, kind: input, shape index: {}]
  %s5 = inlined_call_operand.vmem [shape: f32[16,32], index: 5, kind: input, shape index: {}]
  %s6 = inlined_call_operand.vmem [shape: f32[1,32], index: 6, kind: input, shape index: {}]
  %s7 = inlined_call_operand.vmem [shape: f32[32,16], index: 7, kind: input, shape index: {}]
  %s8 = inlined_call_operand.vmem [shape: f32[1,16], index: 8, kind: input, shape index: {}]
  %s9 = inlined_call_operand.vmem [shape: f32[16,32], index: 9, kind: input, shape index: {}]
  %s10 = inlined_call_operand.vmem [shape: f32[1,32], index: 10, kind: input, shape index: {}]
  %s11 = inlined_call_operand.vmem [shape: f32[32,64], index: 11, kind: input, shape index: {}]
  %s12 = inlined_call_operand.vmem [shape: f32[1,64], index: 12, kind: input, shape index: {}]
  %s13 = inlined_call_operand.vmem [shape: f32[4,32], index: 13, kind: input, shape index: {}]
  %s14 = inlined_call_operand.hbm [shape: f32[8,64], index: 14, kind: output, shape index: {0}]
  %s15 = inlined_call_operand.hbm [shape: f32[8,32], index: 15, kind: output, shape index: {1}]
  %s16 = inlined_call_operand.vmem [shape: f32[8,4], index: 16, kind: output, shape index: {2}]
  %s17 = inlined_call_operand.vmem [shape: f32[8,4], index: 17, kind: output, shape index: {3}]
  %18 = xla_tuple %s14, %s15, %s16, %s17
  %s19 = sld [smem:[#allocation0]]
  $region90: #{tpu_custom_call.1} parent=0
    _
  %s21 = ssub.s32 1, %s19
  %s22 = scalar_select 0, %s21, %s19
  $region1: #{tpu_custom_call.1} parent=0
    #allocation2 [shape = 'u8[4096]{0}', space=vmem, size = 0x1000, scoped, tag = 'output window, operand 0, single buffered']
    #allocation3 [shape = 's32[1]{0}', space=sflag, size = 0x4, scoped, tag = 'scoped memory for tpu_custom_call.1']
    #allocation4 [shape = 'u8[4096]{0}', space=vmem, size = 0x1000, scoped, tag = 'output window, operand 1, single buffered']
    #allocation5 [shape = 's32[1]{0}', space=sflag, size = 0x4, scoped, tag = 'scoped memory for tpu_custom_call.1']
    %23 = vsyncpa [#allocation3], 0
    %24 = vsyncpa [#allocation5], 0
    // Predicated region
    $region2: #{tpu_custom_call.1} parent=1 // pred_check
      _
    $region3: #{tpu_custom_call.1} parent=1 // pred_check_branch
      %26 = sbr.rel (0) target = $region5
    $region4: #{tpu_custom_call.1} parent=1 // pred_region
      _
    $region5: #{tpu_custom_call.1} parent=1 // pred_fallthru
      _
    // Predicated region
    $region6: #{tpu_custom_call.1} parent=1 // pred_check
      _
    $region7: #{tpu_custom_call.1} parent=1 // pred_check_branch
      %28 = sbr.rel (0) target = $region9
    $region8: #{tpu_custom_call.1} parent=1 // pred_region
      _
    $region9: #{tpu_custom_call.1} parent=1 // pred_fallthru
      _
    // Predicated region
    $region10: #{tpu_custom_call.1} parent=1 // pred_check
      _
    $region11: #{tpu_custom_call.1} parent=1 // pred_check_branch
      %30 = sbr.rel (0) target = $region13
    $region12: #{tpu_custom_call.1} parent=1 // pred_region
      _
    $region13: #{tpu_custom_call.1} parent=1 // pred_fallthru
      _
    // Predicated region
    $region14: #{tpu_custom_call.1} parent=1 // pred_check
      _
    $region15: #{tpu_custom_call.1} parent=1 // pred_check_branch
      %32 = sbr.rel (0) target = $region17
    $region16: #{tpu_custom_call.1} parent=1 // pred_region
      _
    $region17: #{tpu_custom_call.1} parent=1 // pred_fallthru
      _
    // Predicated region
    $region18: #{tpu_custom_call.1} parent=1 // pred_check
      _
    $region19: #{tpu_custom_call.1} parent=1 // pred_check_branch
      %34 = sbr.rel (0) target = $region21
    $region20: #{tpu_custom_call.1} parent=1 // pred_region
      _
    $region21: #{tpu_custom_call.1} parent=1 // pred_fallthru
      _
    // Predicated region
    $region22: #{tpu_custom_call.1} parent=1 // pred_check
      _
    $region23: #{tpu_custom_call.1} parent=1 // pred_check_branch
      %36 = sbr.rel (0) target = $region25
    $region24: #{tpu_custom_call.1} parent=1 // pred_region
      _
    $region25: #{tpu_custom_call.1} parent=1 // pred_fallthru
      _
    // Predicated region
    $region26: #{tpu_custom_call.1} parent=1 // pred_check
      _
    $region27: #{tpu_custom_call.1} parent=1 // pred_check_branch
      %38 = sbr.rel (0) target = $region29
    $region28: #{tpu_custom_call.1} parent=1 // pred_region
      _
    $region29: #{tpu_custom_call.1} parent=1 // pred_fallthru
      _
    // Predicated region
    $region30: #{tpu_custom_call.1} parent=1 // pred_check
      _
    $region31: #{tpu_custom_call.1} parent=1 // pred_check_branch
      %40 = sbr.rel (0) target = $region33
    $region32: #{tpu_custom_call.1} parent=1 // pred_region
      _
    $region33: #{tpu_custom_call.1} parent=1 // pred_fallthru
      _
    // Predicated region
    $region34: #{tpu_custom_call.1} parent=1 // pred_check
      _
    $region35: #{tpu_custom_call.1} parent=1 // pred_check_branch
      %42 = sbr.rel (0) target = $region37
    $region36: #{tpu_custom_call.1} parent=1 // pred_region
      _
    $region37: #{tpu_custom_call.1} parent=1 // pred_fallthru
      _
    // Predicated region
    $region38: #{tpu_custom_call.1} parent=1 // pred_check
      _
    $region39: #{tpu_custom_call.1} parent=1 // pred_check_branch
      %44 = sbr.rel (0) target = $region41
    $region40: #{tpu_custom_call.1} parent=1 // pred_region
      _
    $region41: #{tpu_custom_call.1} parent=1 // pred_fallthru
      _
    // Predicated region
    $region42: #{tpu_custom_call.1} parent=1 // pred_check
      _
    $region43: #{tpu_custom_call.1} parent=1 // pred_check_branch
      %46 = sbr.rel (0) target = $region45
    $region44: #{tpu_custom_call.1} parent=1 // pred_region
      _
    $region45: #{tpu_custom_call.1} parent=1 // pred_fallthru
      _
    // Predicated region
    $region46: #{tpu_custom_call.1} parent=1 // pred_check
      _
    $region47: #{tpu_custom_call.1} parent=1 // pred_check_branch
      %48 = sbr.rel (0) target = $region49
    $region48: #{tpu_custom_call.1} parent=1 // pred_region
      _
    $region49: #{tpu_custom_call.1} parent=1 // pred_fallthru
      _
    // Predicated region
    $region50: #{tpu_custom_call.1} parent=1 // pred_check
      _
    $region51: #{tpu_custom_call.1} parent=1 // pred_check_branch
      %50 = sbr.rel (0) target = $region53
    $region52: #{tpu_custom_call.1} parent=1 // pred_region
      _
    $region53: #{tpu_custom_call.1} parent=1 // pred_fallthru
      _
    // Predicated region
    $region54: #{tpu_custom_call.1} parent=1 // pred_check
      _
    $region55: #{tpu_custom_call.1} parent=1 // pred_check_branch
      %52 = sbr.rel (0) target = $region57
    $region56: #{tpu_custom_call.1} parent=1 // pred_region
      _
    $region57: #{tpu_custom_call.1} parent=1 // pred_fallthru
      _
    %v53 = vld [vmem:[%s0] sm:$0xff]
    %v54 = vld [vmem:[%s1] sm:$0xff]
    %v55 = vld [vmem:[%s1 + $0x8] sm:$0xff]
    %v56 = vld [vmem:[%s1 + $0x10] sm:$0xff]
    %v57 = vld [vmem:[%s1 + $0x18] sm:$0xff]
    %v58 = vld [vmem:[%s1 + $0x20] sm:$0xff]
    %v59 = vld [vmem:[%s1 + $0x28] sm:$0xff]
    %v60 = vld [vmem:[%s1 + $0x30] sm:$0xff]
    %v61 = vld [vmem:[%s1 + $0x38] sm:$0xff]
    %v62 = vld [vmem:[%s2] sm:$0x1]
    %v64 = vperm.slane %v62, 0
    %vm66 = vcmask 523264
    %v68 = vsel %vm66, %v53, 0
    %70 = vmatpush.msra.mxu0 0.0
    %71 = vmatpush.msra.mxu0 0.0
    %72 = vmatpush.msra.mxu0 0.0
    %73 = vmatpush.msra.mxu0 0.0
    %74 = vmatpush.msra.mxu0 0.0
    %75 = vmatpush.msra.mxu0 0.0
    %76 = vmatpush.msra.mxu0 0.0
    %77 = vmatpush.msra.mxu0 0.0
    %78 = vmatpush.msra.mxu0 %v61
    %79 = vmatpush.msra.mxu0 %v60
    %80 = vmatpush.msra.mxu0 %v59
    %81 = vmatpush.msra.mxu0 %v58
    %82 = vmatpush.msra.mxu0 %v57
    %83 = vmatpush.msra.mxu0 %v56
    %84 = vmatpush.msra.mxu0 %v55
    %85 = vmatpush.msra.mxu0 %v54
    %86 = vmatmul.f32.gmra.mxu0 %v68
    %v87 = vpop.f32.mrf.mxu0
    %v88 = vadd.f32 %v64, %v87
    %89 = vdwg.mxu0
    %vm90 = vcmp.gt.f32.partialorder %v88, 20.0
    %v91 = vmin.f32 %v88, 20.0
    %v92 = vmul.f32 %v91, 1.442695
    %v93 = vpow.pop %v92
    %v94 = vadd.f32 %v93, 1.0
    %v95 = vlog2.pop %v94
    %v96 = vmul.f32 %v95, 0.6931472
    %v97 = vmul.f32 -0.5, %v93
    %v98 = vadd.f32 %v97, 1.0
    %v99 = vmul.f32 %v98, %v93
    %v100 = vand.u32 2147483647, %v93
    %vm101 = vcmp.lt.f32.partialorder %v100, 0.0004427343
    %v102 = vsel %vm101, %v99, %v96
    %v103 = vsel %vm90, %v88, %v102
    %v104 = vld [vmem:[%s3] sm:$0xff]
    %v105 = vld [vmem:[%s3 + $0x8] sm:$0xff]
    %v106 = vld [vmem:[%s3 + $0x10] sm:$0xff]
    %v107 = vld [vmem:[%s3 + $0x18] sm:$0xff]
    %v108 = vld [vmem:[%s4] sm:$0x1]
    %v110 = vperm.slane %v108, 0
    %vm112 = vcmask 261120
    %v114 = vsel %vm112, %v103, 0
    %116 = vmatpush.msra.mxu0 0.0
    %117 = vmatpush.msra.mxu0 0.0
    %118 = vmatpush.msra.mxu0 0.0
    %119 = vmatpush.msra.mxu0 0.0
    %120 = vmatpush.msra.mxu0 0.0
    %121 = vmatpush.msra.mxu0 0.0
    %122 = vmatpush.msra.mxu0 0.0
    %123 = vmatpush.msra.mxu0 0.0
    %124 = vmatpush.msra.mxu0 0.0
    %125 = vmatpush.msra.mxu0 0.0
    %126 = vmatpush.msra.mxu0 0.0
    %127 = vmatpush.msra.mxu0 0.0
    %128 = vmatpush.msra.mxu0 %v107
    %129 = vmatpush.msra.mxu0 %v106
    %130 = vmatpush.msra.mxu0 %v105
    %131 = vmatpush.msra.mxu0 %v104
    %132 = vmatmul.f32.gmra.mxu0 %v114
    %v133 = vpop.f32.mrf.mxu0
    %v134 = vadd.f32 %v110, %v133
    %135 = vdwg.mxu0
    %vm136 = vcmp.gt.f32.partialorder %v134, 20.0
    %v137 = vmin.f32 %v134, 20.0
    %v138 = vmul.f32 %v137, 1.442695
    %v139 = vpow.pop %v138
    %v140 = vadd.f32 %v139, 1.0
    %v141 = vlog2.pop %v140
    %v142 = vmul.f32 %v141, 0.6931472
    %v143 = vmul.f32 -0.5, %v139
    %v144 = vadd.f32 %v143, 1.0
    %v145 = vmul.f32 %v144, %v139
    %v146 = vand.u32 2147483647, %v139
    %vm147 = vcmp.lt.f32.partialorder %v146, 0.0004427343
    %v148 = vsel %vm147, %v145, %v142
    %v149 = vsel %vm136, %v134, %v148
    %v150 = vld [vmem:[%s5] sm:$0xff]
    %v151 = vld [vmem:[%s5 + $0x8] sm:$0xff]
    %v152 = vld [vmem:[%s6] sm:$0x1]
    %v154 = vperm.slane %v152, 0
    %vm156 = vcmask 130048
    %v158 = vsel %vm156, %v149, 0
    %160 = vmatpush.msra.mxu0 0.0
    %161 = vmatpush.msra.mxu0 0.0
    %162 = vmatpush.msra.mxu0 0.0
    %163 = vmatpush.msra.mxu0 0.0
    %164 = vmatpush.msra.mxu0 0.0
    %165 = vmatpush.msra.mxu0 0.0
    %166 = vmatpush.msra.mxu0 0.0
    %167 = vmatpush.msra.mxu0 0.0
    %168 = vmatpush.msra.mxu0 0.0
    %169 = vmatpush.msra.mxu0 0.0
    %170 = vmatpush.msra.mxu0 0.0
    %171 = vmatpush.msra.mxu0 0.0
    %172 = vmatpush.msra.mxu0 0.0
    %173 = vmatpush.msra.mxu0 0.0
    %174 = vmatpush.msra.mxu0 %v151
    %175 = vmatpush.msra.mxu0 %v150
    %176 = vmatmul.f32.gmra.mxu0 %v158
    %v177 = vpop.f32.mrf.mxu0
    %v178 = vadd.f32 %v154, %v177
    %179 = vdwg.mxu0
    %v180 = vmul.f32 %v178, 0.999995
    %181 = vst.msk [vmem:[#allocation4] sm:$0xff] %vm112, %v180
    %v182 = vld [vmem:[%s7] sm:$0xff]
    %v183 = vld [vmem:[%s7 + $0x8] sm:$0xff]
    %v184 = vld [vmem:[%s7 + $0x10] sm:$0xff]
    %v185 = vld [vmem:[%s7 + $0x18] sm:$0xff]
    %v186 = vld [vmem:[%s8] sm:$0x1]
    %v188 = vperm.slane %v186, 0
    %v191 = vsel %vm112, %v180, 0
    %193 = vmatpush.msra.mxu0 0.0
    %194 = vmatpush.msra.mxu0 0.0
    %195 = vmatpush.msra.mxu0 0.0
    %196 = vmatpush.msra.mxu0 0.0
    %197 = vmatpush.msra.mxu0 0.0
    %198 = vmatpush.msra.mxu0 0.0
    %199 = vmatpush.msra.mxu0 0.0
    %200 = vmatpush.msra.mxu0 0.0
    %201 = vmatpush.msra.mxu0 0.0
    %202 = vmatpush.msra.mxu0 0.0
    %203 = vmatpush.msra.mxu0 0.0
    %204 = vmatpush.msra.mxu0 0.0
    %205 = vmatpush.msra.mxu0 %v185
    %206 = vmatpush.msra.mxu0 %v184
    %207 = vmatpush.msra.mxu0 %v183
    %208 = vmatpush.msra.mxu0 %v182
    %209 = vmatmul.f32.gmra.mxu0 %v191
    %v210 = vpop.f32.mrf.mxu0
    %v211 = vadd.f32 %v188, %v210
    %212 = vdwg.mxu0
    %vm213 = vcmp.gt.f32.partialorder %v211, 20.0
    %v214 = vmin.f32 %v211, 20.0
    %v215 = vmul.f32 %v214, 1.442695
    %v216 = vpow.pop %v215
    %v217 = vadd.f32 %v216, 1.0
    %v218 = vlog2.pop %v217
    %v219 = vmul.f32 %v218, 0.6931472
    %v220 = vmul.f32 -0.5, %v216
    %v221 = vadd.f32 %v220, 1.0
    %v222 = vmul.f32 %v221, %v216
    %v223 = vand.u32 2147483647, %v216
    %vm224 = vcmp.lt.f32.partialorder %v223, 0.0004427343
    %v225 = vsel %vm224, %v222, %v219
    %v226 = vsel %vm213, %v211, %v225
    %v227 = vld [vmem:[%s9] sm:$0xff]
    %v228 = vld [vmem:[%s9 + $0x8] sm:$0xff]
    %v229 = vld [vmem:[%s10] sm:$0x1]
    %v231 = vperm.slane %v229, 0
    %v234 = vsel %vm156, %v226, 0
    %236 = vmatpush.msra.mxu0 0.0
    %237 = vmatpush.msra.mxu0 0.0
    %238 = vmatpush.msra.mxu0 0.0
    %239 = vmatpush.msra.mxu0 0.0
    %240 = vmatpush.msra.mxu0 0.0
    %241 = vmatpush.msra.mxu0 0.0
    %242 = vmatpush.msra.mxu0 0.0
    %243 = vmatpush.msra.mxu0 0.0
    %244 = vmatpush.msra.mxu0 0.0
    %245 = vmatpush.msra.mxu0 0.0
    %246 = vmatpush.msra.mxu0 0.0
    %247 = vmatpush.msra.mxu0 0.0
    %248 = vmatpush.msra.mxu0 0.0
    %249 = vmatpush.msra.mxu0 0.0
    %250 = vmatpush.msra.mxu0 %v228
    %251 = vmatpush.msra.mxu0 %v227
    %252 = vmatmul.f32.gmra.mxu0 %v234
    %v253 = vpop.f32.mrf.mxu0
    %v254 = vadd.f32 %v231, %v253
    %255 = vdwg.mxu0
    %vm256 = vcmp.gt.f32.partialorder %v254, 20.0
    %v257 = vmin.f32 %v254, 20.0
    %v258 = vmul.f32 %v257, 1.442695
    %v259 = vpow.pop %v258
    %v260 = vadd.f32 %v259, 1.0
    %v261 = vlog2.pop %v260
    %v262 = vmul.f32 %v261, 0.6931472
    %v263 = vmul.f32 -0.5, %v259
    %v264 = vadd.f32 %v263, 1.0
    %v265 = vmul.f32 %v264, %v259
    %v266 = vand.u32 2147483647, %v259
    %vm267 = vcmp.lt.f32.partialorder %v266, 0.0004427343
    %v268 = vsel %vm267, %v265, %v262
    %v269 = vsel %vm256, %v254, %v268
    %v270 = vld [vmem:[%s11] sm:$0xff]
    %v271 = vld [vmem:[%s11 + $0x8] sm:$0xff]
    %v272 = vld [vmem:[%s11 + $0x10] sm:$0xff]
    %v273 = vld [vmem:[%s11 + $0x18] sm:$0xff]
    %v274 = vld [vmem:[%s12] sm:$0x1]
    %v276 = vperm.slane %v274, 0
    %v279 = vsel %vm112, %v269, 0
    %281 = vmatpush.msra.mxu0 0.0
    %282 = vmatpush.msra.mxu0 0.0
    %283 = vmatpush.msra.mxu0 0.0
    %284 = vmatpush.msra.mxu0 0.0
    %285 = vmatpush.msra.mxu0 0.0
    %286 = vmatpush.msra.mxu0 0.0
    %287 = vmatpush.msra.mxu0 0.0
    %288 = vmatpush.msra.mxu0 0.0
    %289 = vmatpush.msra.mxu0 0.0
    %290 = vmatpush.msra.mxu0 0.0
    %291 = vmatpush.msra.mxu0 0.0
    %292 = vmatpush.msra.mxu0 0.0
    %293 = vmatpush.msra.mxu0 %v273
    %294 = vmatpush.msra.mxu0 %v272
    %295 = vmatpush.msra.mxu0 %v271
    %296 = vmatpush.msra.mxu0 %v270
    %297 = vmatmul.f32.gmra.mxu0 %v279
    %v298 = vpop.f32.mrf.mxu0
    %v299 = vadd.f32 %v276, %v298
    %300 = vdwg.mxu0
    %301 = vst.msk [vmem:[#allocation2] sm:$0xff] %vm66, %v299
    %v302 = vld [vmem:[%s13] sm:$0xf]
    %v303 = vmul.f32 %v180, %v180
    %v304 = vsel %vm112, %v303, 0.0
    %305 = vadd.xlane.f32.xlu0 %v304
    %v306 = vpop.xlane.xlu0 %305
    %v307 = vmul.f32 %v302, %v302
    %v309 = vsel %vm112, 1.0, 0
    %v312 = vsel %vm112, %v307, 0
    %314 = vmatpush.xpose.msra.mxu0 0.0
    %315 = vmatpush.xpose.msra.mxu0 0.0
    %316 = vmatpush.xpose.msra.mxu0 0.0
    %317 = vmatpush.xpose.msra.mxu0 0.0
    %318 = vmatpush.xpose.msra.mxu0 0.0
    %319 = vmatpush.xpose.msra.mxu0 0.0
    %320 = vmatpush.xpose.msra.mxu0 0.0
    %321 = vmatpush.xpose.msra.mxu0 0.0
    %322 = vmatpush.xpose.msra.mxu0 0.0
    %323 = vmatpush.xpose.msra.mxu0 0.0
    %324 = vmatpush.xpose.msra.mxu0 0.0
    %325 = vmatpush.xpose.msra.mxu0 0.0
    %326 = vmatpush.xpose.msra.mxu0 0.0
    %327 = vmatpush.xpose.msra.mxu0 0.0
    %328 = vmatpush.xpose.msra.mxu0 0.0
    %329 = vmatpush.xpose.msra.mxu0 %v312
    %330 = vmatmul.f32.gmra.mxu0 %v309
    %v331 = vpop.f32.mrf.mxu0
    %v332 = vadd.f32 0.0, %v331
    %333 = vdwg.mxu0
    %v335 = vsel %vm112, %v302, 0
    %337 = vmatpush.xpose.msra.mxu0 0.0
    %338 = vmatpush.xpose.msra.mxu0 0.0
    %339 = vmatpush.xpose.msra.mxu0 0.0
    %340 = vmatpush.xpose.msra.mxu0 0.0
    %341 = vmatpush.xpose.msra.mxu0 0.0
    %342 = vmatpush.xpose.msra.mxu0 0.0
    %343 = vmatpush.xpose.msra.mxu0 0.0
    %344 = vmatpush.xpose.msra.mxu0 0.0
    %345 = vmatpush.xpose.msra.mxu0 0.0
    %346 = vmatpush.xpose.msra.mxu0 0.0
    %347 = vmatpush.xpose.msra.mxu0 0.0
    %348 = vmatpush.xpose.msra.mxu0 0.0
    %349 = vmatpush.xpose.msra.mxu0 0.0
    %350 = vmatpush.xpose.msra.mxu0 0.0
    %351 = vmatpush.xpose.msra.mxu0 0.0
    %352 = vmatpush.xpose.msra.mxu0 %v335
    %353 = vmatmul.f32.gmra.mxu0 %v191
    %v354 = vpop.f32.mrf.mxu0
    %v355 = vadd.f32 0.0, %v354
    %356 = vdwg.mxu0
    %v357 = vperm.slane %v332, 0
    %v358 = vadd.f32 %v306, %v357
    %v359 = vmul.f32 %v355, 2.0
    %v360 = vsub.f32 %v358, %v359
    %v361 = vmax.f32 %v360, 0.0
    %v362 = vadd.f32 %v361, 1.0
    %v363 = vrcp.pop %v362
    %v364 = vmul.f32 %v362, %v363
    %v365 = vsub.f32 1.0, %v364
    %v366 = vmul.f32 %v363, %v365
    %v367 = vadd.f32 %v363, %v366
    %vm368 = vweird.f32 %v362
    %vm369 = vweird.f32 %v363
    %vm370 = vmor %vm368, %vm369
    %v371 = vsel %vm370, %v363, %v367
    %v372 = vand.u32 2147483647, %v362
    %vm373 = vcmp.eq.f32.partialorder %v372, 8.507059e+37
    %v374 = vand.u32 %v362, 2147483648
    %v375 = vor.u32 1.1754944e-38, %v374
    %v376 = vsel %vm373, %v375, %v371
    %v377 = vmul.f32 1.0, %v376
    %vm378 = vcmask 31744
    %v379 = vsel %vm378, %v377, 0.0
    %380 = vadd.xlane.f32.xlu0 %v379
    %v381 = vpop.xlane.xlu0 %380
    %v382 = vrcp.pop %v381
    %v383 = vmul.f32 %v381, %v382
    %v384 = vsub.f32 1.0, %v383
    %v385 = vmul.f32 %v382, %v384
    %v386 = vadd.f32 %v382, %v385
    %vm387 = vweird.f32 %v381
    %vm388 = vweird.f32 %v382
    %vm389 = vmor %vm387, %vm388
    %v390 = vsel %vm389, %v382, %v386
    %v391 = vand.u32 2147483647, %v381
    %vm392 = vcmp.eq.f32.partialorder %v391, 8.507059e+37
    %v393 = vand.u32 %v381, 2147483648
    %v394 = vor.u32 1.1754944e-38, %v393
    %v395 = vsel %vm392, %v394, %v390
    %v396 = vmul.f32 %v377, %v395
    %397 = vst.msk [vmem:[%s16] sm:$0xff] %vm378, %v396
    %vm398 = vcmask 257024
    %v399 = vsel %vm398, %v307, 0.0
    %400 = vadd.xlane.f32.xlu0 %v399
    %v401 = vpop.xlane.xlu0 %400
    %v402 = vmax.f32 %v401, 1e-24
    %v403 = vrsqrt.pop %v402
    %v404 = vmul.f32 %v403, %v402
    %v405 = vmul.f32 %v404, %v403
    %v406 = vmul.f32 0.5, %v405
    %v407 = vsub.f32 1.5, %v406
    %v408 = vmul.f32 %v403, %v407
    %vm409 = vweird.f32 %v402
    %vm410 = vweird.f32 %v403
    %vm411 = vmor %vm409, %vm410
    %v412 = vsel %vm411, %v403, %v408
    %v413 = vmul.f32 %v302, %v412
    %v415 = vsel %vm112, %v413, 0
    %417 = vmatpush.xpose.msra.mxu0 0.0
    %418 = vmatpush.xpose.msra.mxu0 0.0
    %419 = vmatpush.xpose.msra.mxu0 0.0
    %420 = vmatpush.xpose.msra.mxu0 0.0
    %421 = vmatpush.xpose.msra.mxu0 0.0
    %422 = vmatpush.xpose.msra.mxu0 0.0
    %423 = vmatpush.xpose.msra.mxu0 0.0
    %424 = vmatpush.xpose.msra.mxu0 0.0
    %425 = vmatpush.xpose.msra.mxu0 0.0
    %426 = vmatpush.xpose.msra.mxu0 0.0
    %427 = vmatpush.xpose.msra.mxu0 0.0
    %428 = vmatpush.xpose.msra.mxu0 0.0
    %429 = vmatpush.xpose.msra.mxu0 0.0
    %430 = vmatpush.xpose.msra.mxu0 0.0
    %431 = vmatpush.xpose.msra.mxu0 0.0
    %432 = vmatpush.xpose.msra.mxu0 %v415
    %433 = vmatmul.f32.gmra.mxu0 %v191
    %v434 = vpop.f32.mrf.mxu0
    %v435 = vadd.f32 0.0, %v434
    %436 = vdwg.mxu0
    %v437 = vsel %vm378, %v435, -inf
    %438 = vmax.xlane.f32.xlu0 %v437
    %v439 = vpop.xlane.xlu0 %438
    %v440 = vsub.f32 %v435, %v439
    %v441 = vmul.f32 %v440, 1.442695
    %v442 = vpow.pop %v441
    %v443 = vsel %vm378, %v442, 0.0
    %444 = vadd.xlane.f32.xlu0 %v443
    %v445 = vpop.xlane.xlu0 %444
    %v446 = vrcp.pop %v445
    %v447 = vmul.f32 %v445, %v446
    %v448 = vsub.f32 1.0, %v447
    %v449 = vmul.f32 %v446, %v448
    %v450 = vadd.f32 %v446, %v449
    %vm451 = vweird.f32 %v445
    %vm452 = vweird.f32 %v446
    %vm453 = vmor %vm451, %vm452
    %v454 = vsel %vm453, %v446, %v450
    %v455 = vand.u32 2147483647, %v445
    %vm456 = vcmp.eq.f32.partialorder %v455, 8.507059e+37
    %v457 = vand.u32 %v445, 2147483648
    %v458 = vor.u32 1.1754944e-38, %v457
    %v459 = vsel %vm456, %v458, %v454
    %v460 = vmul.f32 %v442, %v459
    %461 = vst.msk [vmem:[%s17] sm:$0xff] %vm378, %v460
    // Predicated region
    $region58: #{tpu_custom_call.1} parent=1 // pred_check
      _
    $region59: #{tpu_custom_call.1} parent=1 // pred_check_branch
      %463 = sbr.rel (0) target = $region61
    $region60: #{tpu_custom_call.1} parent=1 // pred_region
      %465 = vsyncadd [#allocation3], 0
      %s467 = sshll.u32 [#allocation2], 4
      %s468 = int_to_ptr.vmem [resolvable:$true] %s467
      %s469 = sshll.u32 %s14, 4
      %s470 = int_to_ptr.hbm [resolvable:$true] %s469
      %472 = dma.vmem_to_hbm [thread:$0]  %s468, 128, %s470, [#allocation3]
    $region61: #{tpu_custom_call.1} parent=1 // pred_fallthru
      _
    // Predicated region
    $region62: #{tpu_custom_call.1} parent=1 // pred_check
      _
    $region63: #{tpu_custom_call.1} parent=1 // pred_check_branch
      %474 = sbr.rel (0) target = $region65
    $region64: #{tpu_custom_call.1} parent=1 // pred_region
      %476 = vsyncadd [#allocation5], 0
      %s478 = sshll.u32 [#allocation4], 4
      %s479 = int_to_ptr.vmem [resolvable:$true] %s478
      %s480 = sshll.u32 %s15, 4
      %s481 = int_to_ptr.hbm [resolvable:$true] %s480
      %483 = dma.vmem_to_hbm [thread:$0]  %s479, 128, %s481, [#allocation5]
    $region65: #{tpu_custom_call.1} parent=1 // pred_fallthru
      _
    // Predicated region
    $region66: #{tpu_custom_call.1} parent=1 // pred_check
      _
    $region67: #{tpu_custom_call.1} parent=1 // pred_check_branch
      %485 = sbr.rel (0) target = $region69
    $region68: #{tpu_custom_call.1} parent=1 // pred_region
      _
    $region69: #{tpu_custom_call.1} parent=1 // pred_fallthru
      _
    // Predicated region
    $region70: #{tpu_custom_call.1} parent=1 // pred_check
      _
    $region71: #{tpu_custom_call.1} parent=1 // pred_check_branch
      %487 = sbr.rel (0) target = $region73
    $region72: #{tpu_custom_call.1} parent=1 // pred_region
      _
    $region73: #{tpu_custom_call.1} parent=1 // pred_fallthru
      _
    // Predicated region
    $region74: #{tpu_custom_call.1} parent=1 // pred_check
      _
    $region75: #{tpu_custom_call.1} parent=1 // pred_check_branch
      %489 = sbr.rel (0) target = $region77
    $region76: #{tpu_custom_call.1} parent=1 // pred_region
      %491 = dma.done [#allocation3], 128
    $region77: #{tpu_custom_call.1} parent=1 // pred_fallthru
      _
    // Predicated region
    $region78: #{tpu_custom_call.1} parent=1 // pred_check
      _
    $region79: #{tpu_custom_call.1} parent=1 // pred_check_branch
      %493 = sbr.rel (0) target = $region81
    $region80: #{tpu_custom_call.1} parent=1 // pred_region
      %495 = dma.done [#allocation5], 128
    $region81: #{tpu_custom_call.1} parent=1 // pred_fallthru
      _
    // Predicated region
    $region82: #{tpu_custom_call.1} parent=1 // pred_check
      _
    $region83: #{tpu_custom_call.1} parent=1 // pred_check_branch
      %497 = sbr.rel (0) target = $region85
    $region84: #{tpu_custom_call.1} parent=1 // pred_region
      _
    $region85: #{tpu_custom_call.1} parent=1 // pred_fallthru
      _
    // Predicated region
    $region86: #{tpu_custom_call.1} parent=1 // pred_check
      _
    $region87: #{tpu_custom_call.1} parent=1 // pred_check_branch
      %499 = sbr.rel (0) target = $region89
    $region88: #{tpu_custom_call.1} parent=1 // pred_region
      _
    $region89: #{tpu_custom_call.1} parent=1 // pred_fallthru
      _
    %500 = vsyncpa [#allocation3], 1
    %501 = vsyncpa [#allocation5], 1

</llo_original>
